<compile_context>
chip_gen: v7x
topology: tpu7x:2x2x1
jax: 0.10.0
libtpu: 0.0.40
codegen_flags: <defaults>
</compile_context>

<pallas_src>
import functools

import jax
import jax.numpy as jnp
from jax.experimental import pallas as pl
from jax.experimental.pallas import tpu as pltpu


def _local_attention_kernel(x_ref, w_ref, b_cnn_ref, b_att_ref, o_ref, *,
                            win, seq_len, filters):
    """One batch tile (Bt, T, E) per grid step.

    x_ref     : (Bt, T, E)     input rows
    w_ref     : (E, F + win)   fused weight [w_cnn.T | w_att.T]
    b_cnn_ref : (1, F)         cnn-conv bias (VMEM)
    b_att_ref : (1, 1)         attention-conv bias (SMEM scalar)
    o_ref     : (Bt, F)        output (max-pooled over T)
    """
    bt = x_ref.shape[0]
    T, F = seq_len, filters
    pad = (win - 1) // 2

    # --- single fused MXU matmul for the whole batch tile --------------------
    x_flat = x_ref[...].reshape(bt * T, x_ref.shape[-1])            # (Bt*T, E)
    m = jnp.dot(x_flat, w_ref[...],
                preferred_element_type=jnp.float32)                 # (Bt*T, F+win)
    m3 = m.reshape(bt, T, F + win)
    m_cnn = m3[:, :, :F]                                            # lane-0 aligned

    # --- attention logit: 'same' zero padding done in-register ---------------
    #   logit[b, t] = b_att + sum_k m3[b, t + k - pad, F + k]   (0 outside [0,T))
    # Shift along the sublane (T) axis with the XLU (pltpu.roll); mask the
    # wrapped rows with an iota boundary test.  No VMEM scratch round trip.
    t_idx = jax.lax.broadcasted_iota(jnp.int32, (bt, T, 1), 1)
    logit = jnp.zeros((bt, T, 1), jnp.float32)
    for k in range(win):                                            # static unroll
        d = k - pad
        col = m3[:, :, F + k:F + k + 1]                             # (Bt, T, 1)
        if d != 0:
            col = pltpu.roll(col, shift=(-d) % T, axis=1)           # col[t] <- m[t+d]
            col = jnp.where((t_idx + d >= 0) & (t_idx + d < T), col, 0.0)
        logit = logit + col
    score = jax.nn.sigmoid(logit + b_att_ref[0, 0])                 # (Bt, T, 1)

    # --- gate commutes with the (1,E) conv; tanh; max-pool over T ------------
    h = jnp.tanh(score * m_cnn + b_cnn_ref[...])                    # (Bt, T, F)
    o_ref[...] = jnp.max(h, axis=1).astype(o_ref.dtype)             # (Bt, F)


def _auto_block_b(B, T, E, itemsize, *, target_tile_bytes=1 << 20, min_steps=4):
    """Batch rows per grid step: ~1 MiB x tiles and >= min_steps steps.

    block_b is the sublane dim of the (block_b, F) OUTPUT block, so it must be
    a multiple of 8 (or equal to B) to satisfy the (8, 128) tiling rule; the
    leading dim of the 3-D x block itself is unconstrained.
    """
    row_bytes = max(T * E * itemsize, 1)
    cap = max(1, target_tile_bytes // row_bytes)
    if B >= min_steps:
        cap = min(cap, B // min_steps)
    cap = max(1, min(cap, B))
    for d in range(int(cap), 0, -1):
        if B % d == 0 and d % 8 == 0:
            return d
    for d in range(8, B, 8):        # no mult-of-8 divisor under the target:
        if B % d == 0:              # take the smallest one (bigger tiles).
            return d
    return B                        # tiny batches: single tile.


def local_attention(x, w_att, b_att, w_cnn, b_cnn, win, *, block_b=None):
    """x: (B, T, E); w_att: (win, E); b_att: (1,); w_cnn: (F, E); b_cnn: (F,).

    Returns (B, F) float32.  Pass x in bf16 for the reduced-bandwidth matmul
    path (cast at the producer, not here); accumulation and all elementwise
    math stay float32 inside the kernel.
    """
    B, T, E = x.shape
    F = w_cnn.shape[0]
    assert win % 2 == 1, "forward only shape-consistent for odd win_size"

    if block_b is None:
        block_b = _auto_block_b(B, T, E, x.dtype.itemsize)
    assert B % block_b == 0, "block_b must divide B"
    assert block_b == B or block_b % 8 == 0, (
        "block_b is the sublane dim of the (block_b, F) output block; "
        "it must be a multiple of 8 or equal to B")
    num_tiles = B // block_b

    # Fused weight: cnn columns first so the wide slice is lane-aligned at 0.
    w_comb = jnp.concatenate(
        [jnp.transpose(w_cnn), jnp.transpose(w_att)], axis=1).astype(x.dtype)
    b_att2 = b_att.reshape(1, 1).astype(jnp.float32)
    b_cnn2 = b_cnn.reshape(1, F).astype(jnp.float32)

    # VMEM budget from the actual tile footprint (the pipeline double-buffers
    # each blocked operand) + headroom for the f32 in-kernel temporaries.
    itemsize = x.dtype.itemsize
    est = (2 * (block_b * T * E * itemsize            # x tile (double-buffered)
                + E * (F + win) * itemsize            # fused weight
                + block_b * F * 4)                    # f32 output tile
           + 3 * block_b * T * (F + win) * 4          # f32 intermediates
           + (4 << 20))                               # compiler scratch headroom
    vmem_limit = int(max(est, 8 << 20))

    kernel = functools.partial(_local_attention_kernel,
                               win=win, seq_len=T, filters=F)
    out = pl.pallas_call(
        kernel,
        out_shape=jax.ShapeDtypeStruct((B, F), jnp.float32),
        grid=(num_tiles,),
        in_specs=[
            # TODO(synk): on v7x, if xprof still shows exposed DMA between grid
            # steps, add pipeline_mode=pl.Buffered(3) to this x spec.
            pl.BlockSpec((block_b, T, E), lambda i: (i, 0, 0)),
            pl.BlockSpec((E, F + win), lambda i: (0, 0)),
            pl.BlockSpec((1, F), lambda i: (0, 0)),
            pl.BlockSpec(memory_space=pltpu.MemorySpace.SMEM),   # scalar att bias
        ],
        out_specs=pl.BlockSpec((block_b, F), lambda i: (i, 0)),
        compiler_params=pltpu.CompilerParams(
            dimension_semantics=("parallel",),
            vmem_limit_bytes=vmem_limit),
    )(x, w_comb, b_cnn2, b_att2)
    # TODO(synk): for long sequences (block_b*T*E beyond the VMEM budget, esp.
    # v7x's 64 MiB), add a second "arbitrary" grid axis over T with a win-1
    # halo and a running-max output accumulator.
    return out


def local_attention_ref(x, w_att, b_att, w_cnn, b_cnn, win):
    """Pure-JAX reference mirroring the PyTorch forward."""
    B, T, E = x.shape
    pad = (win - 1) // 2
    xpad = jnp.pad(x, ((0, 0), (pad, pad), (0, 0)))
    logit = b_att[0] + sum(
        jnp.einsum('bte,e->bt', xpad[:, k:k + T, :], w_att[k]) for k in range(win))
    score = jax.nn.sigmoid(logit)[..., None]                        # (B, T, 1)
    weighted = x * score
    h = jnp.tanh(jnp.einsum('bte,fe->btf', weighted, w_cnn) + b_cnn)
    return jnp.max(h, axis=1)                                       # (B, F)


if __name__ == "__main__":
    # module hyper-params (small, consistent with the forward); batch=32 so the
    # auto-tiler produces a 4-step pipelined grid (block_b = 8).
    seq_len, win_size, emb_size, filters_num = 8, 3, 32, 16
    batch = 32

    key = jax.random.PRNGKey(0)
    kx, ka, kb, kc, kd = jax.random.split(key, 5)
    x = jax.random.normal(kx, (batch, seq_len, emb_size), jnp.float32)
    w_att = 0.1 * jax.random.normal(ka, (win_size, emb_size), jnp.float32)     # Conv2d(1,1,(win,E)).weight
    b_att = 0.1 * jax.random.normal(kb, (1,), jnp.float32)                     # its bias
    w_cnn = 0.1 * jax.random.normal(kc, (filters_num, emb_size), jnp.float32)  # Conv2d(1,F,(1,E)).weight
    b_cnn = 0.1 * jax.random.normal(kd, (filters_num,), jnp.float32)           # its bias

    ref = local_attention_ref(x, w_att, b_att, w_cnn, b_cnn, win_size)

    # default f32 path, auto-tiled (4 pipelined grid steps)
    out = jax.block_until_ready(
        local_attention(x, w_att, b_att, w_cnn, b_cnn, win_size))
    assert out.shape == (batch, filters_num)
    assert jnp.allclose(out, ref, atol=1e-5, rtol=1e-5), "mismatch vs reference"

    # single-tile path (block_b == B) must also be correct
    out1 = jax.block_until_ready(
        local_attention(x, w_att, b_att, w_cnn, b_cnn, win_size, block_b=batch))
    assert jnp.allclose(out1, ref, atol=1e-5, rtol=1e-5), "block_b=B mismatch"

    # bf16-matmul path: caller hands in x already cast (producer-fused cast);
    # accumulation / sigmoid / tanh stay f32 inside the kernel.
    out_bf16 = jax.block_until_ready(
        local_attention(x.astype(jnp.bfloat16), w_att, b_att, w_cnn, b_cnn,
                        win_size))
    assert jnp.allclose(out_bf16, ref, atol=5e-2, rtol=5e-2), "bf16 path mismatch"

    print("KERNEL_OK")
</pallas_src>

<mosaic_0001>
module attributes {stable_mosaic.version = 11 : i64} {
  func.func @_local_attention_kernel(%arg0: i32, %arg1: memref<8x8x32xf32, #tpu.memory_space<vmem>>, %arg2: memref<32x19xf32, #tpu.memory_space<vmem>>, %arg3: memref<1x16xf32, #tpu.memory_space<vmem>>, %arg4: memref<1x1xf32, #tpu.memory_space<smem>>, %arg5: memref<8x16xf32, #tpu.memory_space<vmem>>) attributes {dimension_semantics = [#tpu.dimension_semantics<parallel>], iteration_bounds = array<i64: 4>, scalar_prefetch = 0 : i64, scratch_operands = 0 : i64, tpu.core_type = #tpu.core_type<tc>, window_params = [{transform_indices = @transform_0, window_bounds = array<i64: 8, 8, 32>}, {pipeline_mode = #tpu.pipeline_mode<synchronous>, transform_indices = @transform_1, window_bounds = array<i64: 32, 19>}, {pipeline_mode = #tpu.pipeline_mode<synchronous>, transform_indices = @transform_2, window_bounds = array<i64: 1, 16>}, {transform_indices = @transform_3, window_bounds = array<i64: 1, 1>}, {transform_indices = @transform_4, window_bounds = array<i64: 8, 16>}]} {
    %c0 = arith.constant 0 : index
    %c0_0 = arith.constant 0 : index
    %c0_1 = arith.constant 0 : index
    %0 = vector.load %arg1[%c0, %c0_0, %c0_1] : memref<8x8x32xf32, #tpu.memory_space<vmem>>, vector<8x8x32xf32>
    %1 = vector.shape_cast %0 : vector<8x8x32xf32> to vector<64x32xf32>
    %c0_2 = arith.constant 0 : index
    %c0_3 = arith.constant 0 : index
    %2 = vector.load %arg2[%c0_2, %c0_3] : memref<32x19xf32, #tpu.memory_space<vmem>>, vector<32x19xf32>
    %cst = arith.constant dense<0.000000e+00> : vector<64x19xf32>
    %3 = tpu.matmul %1, %2, %cst {dimension_numbers = #tpu.dot_dimension_numbers<[1], [0], [0], [1], [0, 0, 1, 1], [], []>} : vector<64x32xf32>, vector<32x19xf32>, vector<64x19xf32> -> vector<64x19xf32>
    %4 = vector.shape_cast %3 : vector<64x19xf32> to vector<8x8x19xf32>
    %5 = vector.extract_strided_slice %4 {offsets = [0, 0, 0], sizes = [8, 8, 16], strides = [1, 1, 1]} : vector<8x8x19xf32> to vector<8x8x16xf32>
    %6 = tpu.iota {dimensions = array<i32: 1>} : vector<8x8x1xi32>
    %cst_4 = arith.constant 0.000000e+00 : f32
    %7 = vector.broadcast %cst_4 : f32 to vector<8x8x1xf32>
    %8 = vector.extract_strided_slice %4 {offsets = [0, 0, 16], sizes = [8, 8, 1], strides = [1, 1, 1]} : vector<8x8x19xf32> to vector<8x8x1xf32>
    %c1_i32 = arith.constant 1 : i32
    %9 = tpu.dynamic_rotate %8 by %c1_i32 dim 1 : vector<8x8x1xf32>, i32 -> vector<8x8x1xf32>
    %c-1_i32 = arith.constant -1 : i32
    %10 = vector.broadcast %c-1_i32 : i32 to vector<8x8x1xi32>
    %11 = arith.addi %6, %10 : vector<8x8x1xi32>
    %c0_i32 = arith.constant 0 : i32
    %12 = vector.broadcast %c0_i32 : i32 to vector<8x8x1xi32>
    %13 = arith.cmpi sge, %11, %12 : vector<8x8x1xi32>
    %c-1_i32_5 = arith.constant -1 : i32
    %14 = vector.broadcast %c-1_i32_5 : i32 to vector<8x8x1xi32>
    %15 = arith.addi %6, %14 : vector<8x8x1xi32>
    %c8_i32 = arith.constant 8 : i32
    %16 = vector.broadcast %c8_i32 : i32 to vector<8x8x1xi32>
    %17 = arith.cmpi slt, %15, %16 : vector<8x8x1xi32>
    %18 = arith.andi %13, %17 : vector<8x8x1xi1>
    %cst_6 = arith.constant 0.000000e+00 : f32
    %19 = vector.broadcast %cst_6 : f32 to vector<8x8x1xf32>
    %20 = arith.select %18, %9, %19 : vector<8x8x1xi1>, vector<8x8x1xf32>
    %21 = arith.addf %7, %20 : vector<8x8x1xf32>
    %22 = vector.extract_strided_slice %4 {offsets = [0, 0, 17], sizes = [8, 8, 1], strides = [1, 1, 1]} : vector<8x8x19xf32> to vector<8x8x1xf32>
    %23 = arith.addf %21, %22 : vector<8x8x1xf32>
    %24 = vector.extract_strided_slice %4 {offsets = [0, 0, 18], sizes = [8, 8, 1], strides = [1, 1, 1]} : vector<8x8x19xf32> to vector<8x8x1xf32>
    %c7_i32 = arith.constant 7 : i32
    %25 = tpu.dynamic_rotate %24 by %c7_i32 dim 1 : vector<8x8x1xf32>, i32 -> vector<8x8x1xf32>
    %c1_i32_7 = arith.constant 1 : i32
    %26 = vector.broadcast %c1_i32_7 : i32 to vector<8x8x1xi32>
    %27 = arith.addi %6, %26 : vector<8x8x1xi32>
    %c0_i32_8 = arith.constant 0 : i32
    %28 = vector.broadcast %c0_i32_8 : i32 to vector<8x8x1xi32>
    %29 = arith.cmpi sge, %27, %28 : vector<8x8x1xi32>
    %c1_i32_9 = arith.constant 1 : i32
    %30 = vector.broadcast %c1_i32_9 : i32 to vector<8x8x1xi32>
    %31 = arith.addi %6, %30 : vector<8x8x1xi32>
    %c8_i32_10 = arith.constant 8 : i32
    %32 = vector.broadcast %c8_i32_10 : i32 to vector<8x8x1xi32>
    %33 = arith.cmpi slt, %31, %32 : vector<8x8x1xi32>
    %34 = arith.andi %29, %33 : vector<8x8x1xi1>
    %cst_11 = arith.constant 0.000000e+00 : f32
    %35 = vector.broadcast %cst_11 : f32 to vector<8x8x1xf32>
    %36 = arith.select %34, %25, %35 : vector<8x8x1xi1>, vector<8x8x1xf32>
    %37 = arith.addf %23, %36 : vector<8x8x1xf32>
    %c0_12 = arith.constant 0 : index
    %c0_13 = arith.constant 0 : index
    %38 = memref.load %arg4[%c0_12, %c0_13] : memref<1x1xf32, #tpu.memory_space<smem>>
    %39 = vector.broadcast %38 : f32 to vector<8x8x1xf32>
    %40 = arith.addf %37, %39 : vector<8x8x1xf32>
    %41 = arith.negf %40 : vector<8x8x1xf32>
    %42 = math.exp %41 : vector<8x8x1xf32>
    %cst_14 = arith.constant 1.000000e+00 : f32
    %43 = vector.broadcast %cst_14 : f32 to vector<8x8x1xf32>
    %44 = arith.addf %43, %42 : vector<8x8x1xf32>
    %45 = arith.divf %43, %44 : vector<8x8x1xf32>
    %46 = vector.broadcast %45 : vector<8x8x1xf32> to vector<8x8x16xf32>
    %47 = arith.mulf %46, %5 : vector<8x8x16xf32>
    %c0_15 = arith.constant 0 : index
    %c0_16 = arith.constant 0 : index
    %48 = vector.load %arg3[%c0_15, %c0_16] : memref<1x16xf32, #tpu.memory_space<vmem>>, vector<1x16xf32>
    %49 = vector.shape_cast %48 : vector<1x16xf32> to vector<1x1x16xf32>
    %50 = vector.broadcast %49 : vector<1x1x16xf32> to vector<8x8x16xf32>
    %51 = arith.addf %47, %50 : vector<8x8x16xf32>
    %52 = math.tanh %51 : vector<8x8x16xf32>
    %cst_17 = arith.constant dense<0xFF800000> : vector<8x16xf32>
    %53 = vector.multi_reduction <maximumf>, %52, %cst_17 [1] : vector<8x8x16xf32> to vector<8x16xf32>
    %c0_18 = arith.constant 0 : index
    %c0_19 = arith.constant 0 : index
    %54 = vector.load %arg5[%c0_18, %c0_19] : memref<8x16xf32, #tpu.memory_space<vmem>>, vector<8x16xf32>
    tpu.vector_store %arg5[%c0_18, %c0_19], %53 {strides = array<i32>} : memref<8x16xf32, #tpu.memory_space<vmem>>, vector<8x16xf32>,
    return
  }
  func.func @transform_0(%arg0: i32) -> (i32, i32, i32) {
    %c0_i32 = arith.constant 0 : i32
    %c0_i32_0 = arith.constant 0 : i32
    %c0_i32_1 = arith.constant 0 : i32
    return %arg0, %c0_i32, %c0_i32_0 : i32, i32, i32
  }
  func.func @transform_1(%arg0: i32) -> (i32, i32) {
    %c0_i32 = arith.constant 0 : i32
    %c0_i32_0 = arith.constant 0 : i32
    %c0_i32_1 = arith.constant 0 : i32
    return %c0_i32, %c0_i32_0 : i32, i32
  }
  func.func @transform_2(%arg0: i32) -> (i32, i32) {
    %c0_i32 = arith.constant 0 : i32
    %c0_i32_0 = arith.constant 0 : i32
    %c0_i32_1 = arith.constant 0 : i32
    return %c0_i32, %c0_i32_0 : i32, i32
  }
  func.func @transform_3(%arg0: i32) -> (i32, i32) {
    %c0_i32 = arith.constant 0 : i32
    %c0_i32_0 = arith.constant 0 : i32
    %c0_i32_1 = arith.constant 0 : i32
    return %c0_i32, %c0_i32_0 : i32, i32
  }
  func.func @transform_4(%arg0: i32) -> (i32, i32) {
    %c0_i32 = arith.constant 0 : i32
    %c0_i32_0 = arith.constant 0 : i32
    return %arg0, %c0_i32 : i32, i32
  }
}

</mosaic_0001>

<llo_original>
// kernel: tpu_custom_call.1
$region0: #{tpu_custom_call.1}
  #allocation0 [shape = 'u32[]', space=smem, size = 0x4, offset = 0x4, fixed_abs, tag = 'smem constant byte address 0x4 - core index']
  #allocation1 [shape = 'u32[144,128]{1,0:T(1,128)}', space=vmem, size = 0x12000, scoped, tag = 'internal scratch']
  #allocation2 [shape = 'f32[1,1]{1,0:T(1,128)S(6)}', space=smem, size = 0x200, scoped, tag = 'scoped memory for tpu_custom_call.1']
  %s0 = inlined_call_operand.hbm [shape: f32[32,8,32], index: 0, kind: input, shape index: {}]
  %s1 = inlined_call_operand.vmem [shape: f32[32,19], index: 1, kind: input, shape index: {}]
  %s2 = inlined_call_operand.vmem [shape: f32[1,16], index: 2, kind: input, shape index: {}]
  %s3 = inlined_call_operand.<no memory space> [shape: f32[1,1], index: 3, kind: input, shape index: {}]
  %s4 = inlined_call_operand.vmem [shape: f32[32,16], index: 4, kind: output, shape index: {}]
  %s5 = sld [smem:[#allocation0]]
  $region53: #{tpu_custom_call.1} parent=0
    _
  %s7 = ssub.s32 1, %s5
  %s8 = scalar_select 0, %s7, %s5
  %9 = sst [smem:[#allocation2]] %s3
  $region1: #{tpu_custom_call.1} parent=0
    #allocation3 [shape = 'u8[65536]{0}', space=vmem, size = 0x10000, scoped, tag = 'input window, operand 0']
    #allocation4 [shape = 's32[2]{0}', space=sflag, size = 0x8, scoped, tag = 'scoped memory for tpu_custom_call.1']
    %10 = vsyncpa [#allocation4], 0
    %s11 = scalar_lea.sflag [#allocation4], 1
    %12 = vsyncpa %s11, 0
    loop: start=0, step=1, limit=6
    $region2: #{tpu_custom_call.1} parent=1 // loop_pre_header
      _
    $region3: #{tpu_custom_call.1} parent=1 // loop_header
      %s14 = sphi 0, %s18
      %p15 = scmp.ge.s32.totalorder %s14, 6
      %s24 = sphi 0, %s26
      %s27 = sphi 0, %s24
      %s28 = sphi 0, %s27
      %s44 = sphi 0, %s28
      %s48 = sphi 0, %s48
      %s50 = sphi 0, %s48
      %s51 = sphi 0, %s50
      %s65 = sphi 0, %s51
      %s69 = sphi 0, %s69
      %s71 = sphi 0, %s69
      %s72 = sphi 0, %s71
      %s86 = sphi 0, %s72
      %s90 = sphi 0, %s90
      %s92 = sphi 0, %s90
      %s93 = sphi 0, %s92
      %s107 = sphi 0, %s93
      %s113 = sphi 0, %s115
      %s116 = sphi 0, %s113
      %s117 = sphi 0, %s116
      %s133 = sphi 0, %s117
    $region4: #{tpu_custom_call.1} parent=1 // loop_header_branch
      %17 = sbr.rel (%p15) target = $region8
    $region5: #{tpu_custom_call.1} parent=1 // loop_body
      %s19 = ssub.s32 %s14, 1
      %s20 = ssub.s32 %s14, 2
      %s21 = sadd.s32 %s14, 1
      %s22 = ssub.s32 %s14, %s21
      %p23 = scmp.eq.s32.totalorder %s22, 0
      %s25 = sadd.s32 %s24, 1
      %s26 = scalar_select %p23, %s24, %s25
      %p29 = pneg %p23
      %p30 = scmp.eq.s32.totalorder %s14, 3
      %p31 = por %p29, %p30
      %p32 = scmp.ne.s32.totalorder %s24, %s27
      %p33 = scmp.eq.s32.totalorder %s14, 0
      %p34 = por %p32, %p33
      %p35 = scmp.ne.s32.totalorder %s24, %s27
      %p36 = scmp.eq.s32.totalorder %s19, 3
      %p37 = por %p35, %p36
      %p38 = scmp.ne.s32.totalorder %s27, %s28
      %p39 = scmp.eq.s32.totalorder %s19, 0
      %p40 = por %p38, %p39
      %p41 = scmp.ne.s32.totalorder %s27, %s28
      %p42 = scmp.eq.s32.totalorder %s20, 3
      %p43 = por %p41, %p42
      %p45 = scmp.ne.s32.totalorder %s28, %s44
      %p46 = scmp.eq.s32.totalorder %s20, 0
      %p47 = por %p45, %p46
      %s49 = sadd.s32 %s48, 1
      %p52 = scmp.eq.s32.totalorder %s14, 3
      %p53 = scmp.ne.s32.totalorder %s48, %s50
      %p54 = scmp.eq.s32.totalorder %s14, 0
      %p55 = por %p53, %p54
      %p56 = scmp.ne.s32.totalorder %s48, %s50
      %p57 = scmp.eq.s32.totalorder %s19, 3
      %p58 = por %p56, %p57
      %p59 = scmp.ne.s32.totalorder %s50, %s51
      %p60 = scmp.eq.s32.totalorder %s19, 0
      %p61 = por %p59, %p60
      %p62 = scmp.ne.s32.totalorder %s50, %s51
      %p63 = scmp.eq.s32.totalorder %s20, 3
      %p64 = por %p62, %p63
      %p66 = scmp.ne.s32.totalorder %s51, %s65
      %p67 = scmp.eq.s32.totalorder %s20, 0
      %p68 = por %p66, %p67
      %s70 = sadd.s32 %s69, 1
      %p73 = scmp.eq.s32.totalorder %s14, 3
      %p74 = scmp.ne.s32.totalorder %s69, %s71
      %p75 = scmp.eq.s32.totalorder %s14, 0
      %p76 = por %p74, %p75
      %p77 = scmp.ne.s32.totalorder %s69, %s71
      %p78 = scmp.eq.s32.totalorder %s19, 3
      %p79 = por %p77, %p78
      %p80 = scmp.ne.s32.totalorder %s71, %s72
      %p81 = scmp.eq.s32.totalorder %s19, 0
      %p82 = por %p80, %p81
      %p83 = scmp.ne.s32.totalorder %s71, %s72
      %p84 = scmp.eq.s32.totalorder %s20, 3
      %p85 = por %p83, %p84
      %p87 = scmp.ne.s32.totalorder %s72, %s86
      %p88 = scmp.eq.s32.totalorder %s20, 0
      %p89 = por %p87, %p88
      %s91 = sadd.s32 %s90, 1
      %p94 = scmp.eq.s32.totalorder %s14, 3
      %p95 = scmp.ne.s32.totalorder %s90, %s92
      %p96 = scmp.eq.s32.totalorder %s14, 0
      %p97 = por %p95, %p96
      %p98 = scmp.ne.s32.totalorder %s90, %s92
      %p99 = scmp.eq.s32.totalorder %s19, 3
      %p100 = por %p98, %p99
      %p101 = scmp.ne.s32.totalorder %s92, %s93
      %p102 = scmp.eq.s32.totalorder %s19, 0
      %p103 = por %p101, %p102
      %p104 = scmp.ne.s32.totalorder %s92, %s93
      %p105 = scmp.eq.s32.totalorder %s20, 3
      %p106 = por %p104, %p105
      %p108 = scmp.ne.s32.totalorder %s93, %s107
      %p109 = scmp.eq.s32.totalorder %s20, 0
      %p110 = por %p108, %p109
      %s111 = ssub.s32 %s14, %s21
      %p112 = scmp.eq.s32.totalorder %s111, 0
      %s114 = sadd.s32 %s113, 1
      %s115 = scalar_select %p112, %s113, %s114
      %p118 = pneg %p112
      %p119 = scmp.eq.s32.totalorder %s14, 3
      %p120 = por %p118, %p119
      %p121 = scmp.ne.s32.totalorder %s113, %s116
      %p122 = scmp.eq.s32.totalorder %s14, 0
      %p123 = por %p121, %p122
      %p124 = scmp.ne.s32.totalorder %s113, %s116
      %p125 = scmp.eq.s32.totalorder %s19, 3
      %p126 = por %p124, %p125
      %p127 = scmp.ne.s32.totalorder %s116, %s117
      %p128 = scmp.eq.s32.totalorder %s19, 0
      %p129 = por %p127, %p128
      %p130 = scmp.ne.s32.totalorder %s116, %s117
      %p131 = scmp.eq.s32.totalorder %s20, 3
      %p132 = por %p130, %p131
      %p134 = scmp.ne.s32.totalorder %s117, %s133
      %p135 = scmp.eq.s32.totalorder %s20, 0
      %p136 = por %p134, %p135
      %p137 = scmp.le.s32.totalorder 1, %s14
      %p138 = scmp.lt.s32.totalorder %s14, 5
      %p139 = pnand %p137, %p138
      %p140 = pneg %p139
      // Predicated region
      $region9: #{tpu_custom_call.1} parent=5 // pred_check
        _
      $region10: #{tpu_custom_call.1} parent=5 // pred_check_branch
        %142 = sbr.rel (%p139) target = $region12
      $region11: #{tpu_custom_call.1} parent=5 // pred_region
        %s143 = ssub.s32 %s14, 1
        // Predicated region
        $region13: #{tpu_custom_call.1} parent=11 // pred_check
          %p144 = pneg %p61
        $region14: #{tpu_custom_call.1} parent=11 // pred_check_branch
          %146 = sbr.rel (%p144) target = $region16
        $region15: #{tpu_custom_call.1} parent=11 // pred_region
          _
        $region16: #{tpu_custom_call.1} parent=11 // pred_fallthru
          _
        // Predicated region
        $region17: #{tpu_custom_call.1} parent=11 // pred_check
          %p147 = pneg %p82
        $region18: #{tpu_custom_call.1} parent=11 // pred_check_branch
          %149 = sbr.rel (%p147) target = $region20
        $region19: #{tpu_custom_call.1} parent=11 // pred_region
          _
        $region20: #{tpu_custom_call.1} parent=11 // pred_fallthru
          _
        // Predicated region
        $region21: #{tpu_custom_call.1} parent=11 // pred_check
          %p150 = pneg %p103
        $region22: #{tpu_custom_call.1} parent=11 // pred_check_branch
          %152 = sbr.rel (%p150) target = $region24
        $region23: #{tpu_custom_call.1} parent=11 // pred_region
          _
        $region24: #{tpu_custom_call.1} parent=11 // pred_fallthru
          _
      $region12: #{tpu_custom_call.1} parent=5 // pred_fallthru
        _
      %p153 = scmp.lt.s32.totalorder %s14, 4
      // Predicated region
      $region25: #{tpu_custom_call.1} parent=5 // pred_check
        %p154 = pneg %p153
      $region26: #{tpu_custom_call.1} parent=5 // pred_check_branch
        %156 = sbr.rel (%p154) target = $region28
      $region27: #{tpu_custom_call.1} parent=5 // pred_region
        // Predicated region
        $region29: #{tpu_custom_call.1} parent=27 // pred_check
          %p157 = pneg %p34
        $region30: #{tpu_custom_call.1} parent=27 // pred_check_branch
          %159 = sbr.rel (%p157) target = $region32
        $region31: #{tpu_custom_call.1} parent=27 // pred_region
          %s160 = sand.u32 %s24, 1
          %s161 = scalar_lea.sflag [#allocation4], %s160
          %s162 = sand.u32 %s24, 1
          %s163 = smul.addr %s162, 64
          %s164 = scalar_lea.vmem [#allocation3], %s163
          %s165 = smul.u32 8, %s14
          %s167 = ssub.s32 1024, 1024
          %168 = vsyncadd %s161, %s167
          %s169 = smul.addr %s165, 128
          %s170 = scalar_lea.hbm %s0, %s169
          %s171 = sshll.u32 %s164, 4
          %s172 = int_to_ptr.vmem [resolvable:$true] %s171
          %177 = dma.hbm_to_vmem [thread:$0]  %s170, 1024, %s172, %s161, 128, 128, 8
        $region32: #{tpu_custom_call.1} parent=27 // pred_fallthru
          _
      $region28: #{tpu_custom_call.1} parent=5 // pred_fallthru
        _
      %p178 = scmp.le.s32.totalorder 1, %s14
      %p179 = scmp.lt.s32.totalorder %s14, 5
      %p180 = pnand %p178, %p179
      %p181 = pneg %p180
      // Predicated region
      $region33: #{tpu_custom_call.1} parent=5 // pred_check
        _
      $region34: #{tpu_custom_call.1} parent=5 // pred_check_branch
        %183 = sbr.rel (%p180) target = $region36
      $region35: #{tpu_custom_call.1} parent=5 // pred_region
        %s184 = ssub.s32 %s14, 1
        %s185 = sand.u32 %s27, 1
        %s186 = scalar_lea.sflag [#allocation4], %s185
        %s187 = sand.u32 %s27, 1
        %s188 = smul.addr %s187, 64
        %s189 = scalar_lea.vmem [#allocation3], %s188
        // Predicated region
        $region37: #{tpu_custom_call.1} parent=35 // pred_check
          %p190 = pneg %p40
        $region38: #{tpu_custom_call.1} parent=35 // pred_check_branch
          %192 = sbr.rel (%p190) target = $region40
        $region39: #{tpu_custom_call.1} parent=35 // pred_region
          %193 = dma.done %s186, 1024
        $region40: #{tpu_custom_call.1} parent=35 // pred_fallthru
          _
        %s194 = sand.u32 %s27, 1
        %s195 = scalar_lea.sflag [#allocation4], %s194
        %s196 = sand.u32 %s27, 1
        %s197 = smul.addr %s196, 64
        %s198 = scalar_lea.vmem [#allocation3], %s197
        %p199 = pneg %p40
        %p200 = pneg %p37
        %p201 = pneg %p61
        %p202 = pneg %p58
        %p203 = pneg %p82
        %p204 = pneg %p79
        %p205 = pneg %p103
        %p206 = pneg %p100
        %p207 = pneg %p129
        %p208 = pneg %p126
        %p209 = scmp.lt.s32.totalorder %s19, 3
        %s210 = scalar_select %p209, %s19, 3
        %s211 = smul.addr %s210, 8
        %s212 = scalar_lea.vmem %s4, %s211
        %s213 = smul.u32 8, %s19
        %p214 = scmp.lt.s32.totalorder %s19, 3
        %s215 = scalar_select %p214, %s19, 3
        %s216 = smul.addr %s215, 8
        %s217 = scalar_lea.vmem %s4, %s216
        %v218 = vld [vmem:[%s189] sm:$0xff]
        %v219 = vld [vmem:[%s189 + $0x8] sm:$0xff]
        %v220 = vld [vmem:[%s189 + $0x10] sm:$0xff]
        %v221 = vld [vmem:[%s189 + $0x18] sm:$0xff]
        %v222 = vld [vmem:[%s189 + $0x20] sm:$0xff]
        %v223 = vld [vmem:[%s189 + $0x28] sm:$0xff]
        %v224 = vld [vmem:[%s189 + $0x30] sm:$0xff]
        %v225 = vld [vmem:[%s189 + $0x38] sm:$0xff]
        %v226 = vld [vmem:[%s1] sm:$0xff]
        %v227 = vld [vmem:[%s1 + $0x8] sm:$0xff]
        %v228 = vld [vmem:[%s1 + $0x10] sm:$0xff]
        %v229 = vld [vmem:[%s1 + $0x18] sm:$0xff]
        %vm230 = vcmask 261120
        %v232 = vsel %vm230, %v218, 0
        %v235 = vsel %vm230, %v219, 0
        %v238 = vsel %vm230, %v220, 0
        %v241 = vsel %vm230, %v221, 0
        %v244 = vsel %vm230, %v222, 0
        %v247 = vsel %vm230, %v223, 0
        %v250 = vsel %vm230, %v224, 0
        %v253 = vsel %vm230, %v225, 0
        %255 = vmatprep.subr.mxu0 0.0
        %256 = vmatpush1.msra.mxu0 %v226
        %257 = vmatprep.subr.mxu0 0.0
        %258 = vmatpush1.msra.mxu0 %v227
        %259 = vmatprep.subr.mxu0 0.0
        %260 = vmatpush1.msra.mxu0 %v228
        %261 = vmatprep.subr.mxu0 0.0
        %262 = vmatpush1.msra.mxu0 %v229
        %263 = vmatprep.subr.mxu0 0.0
        %264 = vmatpush1.msra.mxu0 0.0
        %265 = vmatprep.subr.mxu0 0.0
        %266 = vmatpush1.msra.mxu0 0.0
        %267 = vmatprep.subr.mxu0 0.0
        %268 = vmatpush1.msra.mxu0 0.0
        %269 = vmatprep.subr.mxu0 0.0
        %270 = vmatpush1.msra.mxu0 0.0
        %271 = vmatprep.subr.mxu0 0.0
        %272 = vmatpush1.msra.mxu0 0.0
        %273 = vmatprep.subr.mxu0 0.0
        %274 = vmatpush1.msra.mxu0 0.0
        %275 = vmatprep.subr.mxu0 0.0
        %276 = vmatpush1.msra.mxu0 0.0
        %277 = vmatprep.subr.mxu0 0.0
        %278 = vmatpush1.msra.mxu0 0.0
        %279 = vmatprep.subr.mxu0 0.0
        %280 = vmatpush1.msra.mxu0 0.0
        %281 = vmatprep.subr.mxu0 0.0
        %282 = vmatpush1.msra.mxu0 0.0
        %283 = vmatprep.subr.mxu0 0.0
        %284 = vmatpush1.msra.mxu0 0.0
        %285 = vmatprep.subr.mxu0 0.0
        %286 = vmatpush1.msra.mxu0 0.0
        %287 = vmatprep.subr.mxu0 0.0
        %288 = vmatpush1.msra.mxu0 0.0
        %289 = vmatprep.subr.mxu0 0.0
        %290 = vmatpush1.msra.mxu0 0.0
        %291 = vmatprep.subr.mxu0 0.0
        %292 = vmatpush1.msra.mxu0 0.0
        %293 = vmatprep.subr.mxu0 0.0
        %294 = vmatpush1.msra.mxu0 0.0
        %295 = vmatprep.subr.mxu0 0.0
        %296 = vmatpush1.msra.mxu0 0.0
        %297 = vmatprep.subr.mxu0 0.0
        %298 = vmatpush1.msra.mxu0 0.0
        %299 = vmatprep.subr.mxu0 0.0
        %300 = vmatpush1.msra.mxu0 0.0
        %301 = vmatprep.subr.mxu0 0.0
        %302 = vmatpush1.msra.mxu0 0.0
        %303 = vmatprep.subr.mxu0 0.0
        %304 = vmatpush1.msra.mxu0 0.0
        %305 = vmatprep.subr.mxu0 0.0
        %306 = vmatpush1.msra.mxu0 0.0
        %307 = vmatprep.subr.mxu0 0.0
        %308 = vmatpush1.msra.mxu0 0.0
        %309 = vmatprep.subr.mxu0 0.0
        %310 = vmatpush1.msra.mxu0 0.0
        %311 = vmatprep.subr.mxu0 0.0
        %312 = vmatpush1.msra.mxu0 0.0
        %313 = vmatprep.subr.mxu0 0.0
        %314 = vmatpush1.msra.mxu0 0.0
        %315 = vmatprep.subr.mxu0 0.0
        %316 = vmatpush1.msra.mxu0 0.0
        %317 = vmatprep.subr.mxu0 0.0
        %318 = vmatpush1.msra.mxu0 0.0
        %319 = vmatprep.mubr.f32.mxu0 0.0
        %320 = vmatmul.mubr.f32.gmra.mrb[0].mxu0 %v232
        %v321 = vpop.f32.mrb[0].mxu0
        %v322 = vadd.f32 0.0, %v321
        %v323 = vpop.f32.mrb[0].mxu0
        %324 = vmatprep.mubr.f32.mxu0 0.0
        %325 = vmatmul.mubr.f32.gmra.mrb[0].mxu0 %v235
        %v326 = vpop.f32.mrb[0].mxu0
        %v327 = vadd.f32 0.0, %v326
        %v328 = vpop.f32.mrb[0].mxu0
        %329 = vmatprep.mubr.f32.mxu0 0.0
        %330 = vmatmul.mubr.f32.gmra.mrb[0].mxu0 %v238
        %v331 = vpop.f32.mrb[0].mxu0
        %v332 = vadd.f32 0.0, %v331
        %v333 = vpop.f32.mrb[0].mxu0
        %334 = vmatprep.mubr.f32.mxu0 0.0
        %335 = vmatmul.mubr.f32.gmra.mrb[0].mxu0 %v241
        %v336 = vpop.f32.mrb[0].mxu0
        %v337 = vadd.f32 0.0, %v336
        %v338 = vpop.f32.mrb[0].mxu0
        %339 = vmatprep.mubr.f32.mxu0 0.0
        %340 = vmatmul.mubr.f32.gmra.mrb[0].mxu0 %v244
        %v341 = vpop.f32.mrb[0].mxu0
        %v342 = vadd.f32 0.0, %v341
        %v343 = vpop.f32.mrb[0].mxu0
        %344 = vmatprep.mubr.f32.mxu0 0.0
        %345 = vmatmul.mubr.f32.gmra.mrb[0].mxu0 %v247
        %v346 = vpop.f32.mrb[0].mxu0
        %v347 = vadd.f32 0.0, %v346
        %v348 = vpop.f32.mrb[0].mxu0
        %349 = vmatprep.mubr.f32.mxu0 0.0
        %350 = vmatmul.mubr.f32.gmra.mrb[0].mxu0 %v250
        %v351 = vpop.f32.mrb[0].mxu0
        %v352 = vadd.f32 0.0, %v351
        %v353 = vpop.f32.mrb[0].mxu0
        %354 = vmatprep.mubr.f32.mxu0 0.0
        %355 = vmatmul.mubr.f32.gmra.mrb[0].mxu0 %v253
        %v356 = vpop.f32.mrb[0].mxu0
        %v357 = vadd.f32 0.0, %v356
        %v358 = vpop.f32.mrb[0].mxu0
        %359 = vdwg.mxu0
        %v360 = vlaneseq
        %v361 = vshrl.u32 %v360, 7
        %370 = vrot.lane.b32.xlu0 %v322, 112
        %v371 = vpop.permute.xlu0 %370
        %372 = vrot.lane.b32.xlu0 %v327, 112
        %v373 = vpop.permute.xlu0 %372
        %374 = vrot.lane.b32.xlu0 %v332, 112
        %v375 = vpop.permute.xlu0 %374
        %376 = vrot.lane.b32.xlu0 %v337, 112
        %v377 = vpop.permute.xlu0 %376
        %378 = vrot.lane.b32.xlu0 %v342, 112
        %v379 = vpop.permute.xlu0 %378
        %380 = vrot.lane.b32.xlu0 %v347, 112
        %v381 = vpop.permute.xlu0 %380
        %382 = vrot.lane.b32.xlu0 %v352, 112
        %v383 = vpop.permute.xlu0 %382
        %384 = vrot.lane.b32.xlu0 %v357, 112
        %v385 = vpop.permute.xlu0 %384
        %v394 = vrot.slane %v371, 7
        %v395 = vrot.slane %v373, 7
        %v396 = vrot.slane %v375, 7
        %v397 = vrot.slane %v377, 7
        %v398 = vrot.slane %v379, 7
        %v399 = vrot.slane %v381, 7
        %v400 = vrot.slane %v383, 7
        %v401 = vrot.slane %v385, 7
        %v402 = vadd.s32 %v361, 4294967295
        %vm403 = vcmp.ge.s32.totalorder %v402, 0
        %vm404 = vcmp.lt.s32.totalorder %v402, 8
        %vm405 = vmand %vm403, %vm404
        %v406 = vsel %vm405, %v394, 0.0
        %v407 = vsel %vm405, %v395, 0.0
        %v408 = vsel %vm405, %v396, 0.0
        %v409 = vsel %vm405, %v397, 0.0
        %v410 = vsel %vm405, %v398, 0.0
        %v411 = vsel %vm405, %v399, 0.0
        %v412 = vsel %vm405, %v400, 0.0
        %v413 = vsel %vm405, %v401, 0.0
        %v414 = vadd.f32 %v406, 0.0
        %v415 = vadd.f32 %v407, 0.0
        %v416 = vadd.f32 %v408, 0.0
        %v417 = vadd.f32 %v409, 0.0
        %v418 = vadd.f32 %v410, 0.0
        %v419 = vadd.f32 %v411, 0.0
        %v420 = vadd.f32 %v412, 0.0
        %v421 = vadd.f32 %v413, 0.0
        %422 = vrot.lane.b32.xlu0 %v322, 111
        %v423 = vpop.permute.xlu0 %422
        %424 = vrot.lane.b32.xlu0 %v327, 111
        %v425 = vpop.permute.xlu0 %424
        %426 = vrot.lane.b32.xlu0 %v332, 111
        %v427 = vpop.permute.xlu0 %426
        %428 = vrot.lane.b32.xlu0 %v337, 111
        %v429 = vpop.permute.xlu0 %428
        %430 = vrot.lane.b32.xlu0 %v342, 111
        %v431 = vpop.permute.xlu0 %430
        %432 = vrot.lane.b32.xlu0 %v347, 111
        %v433 = vpop.permute.xlu0 %432
        %434 = vrot.lane.b32.xlu0 %v352, 111
        %v435 = vpop.permute.xlu0 %434
        %436 = vrot.lane.b32.xlu0 %v357, 111
        %v437 = vpop.permute.xlu0 %436
        %v446 = vadd.f32 %v414, %v423
        %v447 = vadd.f32 %v415, %v425
        %v448 = vadd.f32 %v416, %v427
        %v449 = vadd.f32 %v417, %v429
        %v450 = vadd.f32 %v418, %v431
        %v451 = vadd.f32 %v419, %v433
        %v452 = vadd.f32 %v420, %v435
        %v453 = vadd.f32 %v421, %v437
        %454 = vrot.lane.b32.xlu0 %v322, 110
        %v455 = vpop.permute.xlu0 %454
        %456 = vrot.lane.b32.xlu0 %v327, 110
        %v457 = vpop.permute.xlu0 %456
        %458 = vrot.lane.b32.xlu0 %v332, 110
        %v459 = vpop.permute.xlu0 %458
        %460 = vrot.lane.b32.xlu0 %v337, 110
        %v461 = vpop.permute.xlu0 %460
        %462 = vrot.lane.b32.xlu0 %v342, 110
        %v463 = vpop.permute.xlu0 %462
        %464 = vrot.lane.b32.xlu0 %v347, 110
        %v465 = vpop.permute.xlu0 %464
        %466 = vrot.lane.b32.xlu0 %v352, 110
        %v467 = vpop.permute.xlu0 %466
        %468 = vrot.lane.b32.xlu0 %v357, 110
        %v469 = vpop.permute.xlu0 %468
        %v478 = vrot.slane %v455, 1
        %v479 = vrot.slane %v457, 1
        %v480 = vrot.slane %v459, 1
        %v481 = vrot.slane %v461, 1
        %v482 = vrot.slane %v463, 1
        %v483 = vrot.slane %v465, 1
        %v484 = vrot.slane %v467, 1
        %v485 = vrot.slane %v469, 1
        %v486 = vadd.s32 %v361, 1
        %vm487 = vcmp.ge.s32.totalorder %v486, 0
        %vm488 = vcmp.lt.s32.totalorder %v486, 8
        %vm489 = vmand %vm487, %vm488
        %v490 = vsel %vm489, %v478, 0.0
        %v491 = vsel %vm489, %v479, 0.0
        %v492 = vsel %vm489, %v480, 0.0
        %v493 = vsel %vm489, %v481, 0.0
        %v494 = vsel %vm489, %v482, 0.0
        %v495 = vsel %vm489, %v483, 0.0
        %v496 = vsel %vm489, %v484, 0.0
        %v497 = vsel %vm489, %v485, 0.0
        %v498 = vadd.f32 %v446, %v490
        %v499 = vadd.f32 %v447, %v491
        %v500 = vadd.f32 %v448, %v492
        %v501 = vadd.f32 %v449, %v493
        %v502 = vadd.f32 %v450, %v494
        %v503 = vadd.f32 %v451, %v495
        %v504 = vadd.f32 %v452, %v496
        %v505 = vadd.f32 %v453, %v497
        %s506 = sld [smem:[#allocation2]]
        %v507 = vstv %s506
        %v508 = vadd.f32 %v498, %v507
        %v509 = vadd.f32 %v499, %v507
        %v510 = vadd.f32 %v500, %v507
        %v511 = vadd.f32 %v501, %v507
        %v512 = vadd.f32 %v502, %v507
        %v513 = vadd.f32 %v503, %v507
        %v514 = vadd.f32 %v504, %v507
        %v515 = vadd.f32 %v505, %v507
        %v516 = vxor.u32 %v508, 2147483648
        %v517 = vxor.u32 %v509, 2147483648
        %v518 = vxor.u32 %v510, 2147483648
        %v519 = vxor.u32 %v511, 2147483648
        %v520 = vxor.u32 %v512, 2147483648
        %v521 = vxor.u32 %v513, 2147483648
        %v522 = vxor.u32 %v514, 2147483648
        %v523 = vxor.u32 %v515, 2147483648
        %v524 = vmul.f32 %v516, 1.442695
        %v525 = vpow.pop %v524
        %v526 = vmul.f32 %v517, 1.442695
        %v527 = vpow.pop %v526
        %v528 = vmul.f32 %v518, 1.442695
        %v529 = vpow.pop %v528
        %v530 = vmul.f32 %v519, 1.442695
        %v531 = vpow.pop %v530
        %v532 = vmul.f32 %v520, 1.442695
        %v533 = vpow.pop %v532
        %v534 = vmul.f32 %v521, 1.442695
        %v535 = vpow.pop %v534
        %v536 = vmul.f32 %v522, 1.442695
        %v537 = vpow.pop %v536
        %v538 = vmul.f32 %v523, 1.442695
        %v539 = vpow.pop %v538
        %v540 = vadd.f32 %v525, 1.0
        %v541 = vadd.f32 %v527, 1.0
        %v542 = vadd.f32 %v529, 1.0
        %v543 = vadd.f32 %v531, 1.0
        %v544 = vadd.f32 %v533, 1.0
        %v545 = vadd.f32 %v535, 1.0
        %v546 = vadd.f32 %v537, 1.0
        %v547 = vadd.f32 %v539, 1.0
        %v548 = vrcp.pop %v540
        %v549 = vmul.f32 1.0, %v548
        %v550 = vrcp.pop %v541
        %v551 = vmul.f32 1.0, %v550
        %v552 = vrcp.pop %v542
        %v553 = vmul.f32 1.0, %v552
        %v554 = vrcp.pop %v543
        %v555 = vmul.f32 1.0, %v554
        %v556 = vrcp.pop %v544
        %v557 = vmul.f32 1.0, %v556
        %v558 = vrcp.pop %v545
        %v559 = vmul.f32 1.0, %v558
        %v560 = vrcp.pop %v546
        %v561 = vmul.f32 1.0, %v560
        %v562 = vrcp.pop %v547
        %v563 = vmul.f32 1.0, %v562
        %565 = vset.pattern.permute.xlu0 0
        %566 = vperm.xlu0 %565, %v549
        %v567 = vpop.permute.xlu0 %566
        %570 = vset.pattern.permute.xlu0 0
        %571 = vperm.xlu0 %570, %v551
        %v572 = vpop.permute.xlu0 %571
        %575 = vset.pattern.permute.xlu0 0
        %576 = vperm.xlu0 %575, %v553
        %v577 = vpop.permute.xlu0 %576
        %580 = vset.pattern.permute.xlu0 0
        %581 = vperm.xlu0 %580, %v555
        %v582 = vpop.permute.xlu0 %581
        %585 = vset.pattern.permute.xlu0 0
        %586 = vperm.xlu0 %585, %v557
        %v587 = vpop.permute.xlu0 %586
        %590 = vset.pattern.permute.xlu0 0
        %591 = vperm.xlu0 %590, %v559
        %v592 = vpop.permute.xlu0 %591
        %595 = vset.pattern.permute.xlu0 0
        %596 = vperm.xlu0 %595, %v561
        %v597 = vpop.permute.xlu0 %596
        %600 = vset.pattern.permute.xlu0 0
        %601 = vperm.xlu0 %600, %v563
        %v602 = vpop.permute.xlu0 %601
        %v604 = vmul.f32 %v567, %v322
        %v605 = vmul.f32 %v572, %v327
        %v606 = vmul.f32 %v577, %v332
        %v607 = vmul.f32 %v582, %v337
        %v608 = vmul.f32 %v587, %v342
        %v609 = vmul.f32 %v592, %v347
        %v610 = vmul.f32 %v597, %v352
        %v611 = vmul.f32 %v602, %v357
        %v612 = vld [vmem:[%s2] sm:$0x1]
        %v614 = vlaneseq
        %v615 = vshrl.u32 %v614, 7
        %v616 = vsub.s32 0, %v615
        %v617 = vrot.slane %v612, %v616
        %v619 = vadd.f32 %v604, %v617
        %v620 = vadd.f32 %v605, %v617
        %v621 = vadd.f32 %v606, %v617
        %v622 = vadd.f32 %v607, %v617
        %v623 = vadd.f32 %v608, %v617
        %v624 = vadd.f32 %v609, %v617
        %v625 = vadd.f32 %v610, %v617
        %v626 = vadd.f32 %v611, %v617
        %v627 = vtanh.pop %v619
        %v628 = vtanh.pop %v620
        %v629 = vtanh.pop %v621
        %v630 = vtanh.pop %v622
        %v631 = vtanh.pop %v623
        %v632 = vtanh.pop %v624
        %v633 = vtanh.pop %v625
        %v634 = vtanh.pop %v626
        %vm635 = vcmask 130048
        %v636 = vsel %vm635, %v627, -inf
        %v637 = vrot.slane %v636, 4
        %v638 = vmax.f32 %v636, %v637
        %v639 = vrot.slane %v638, 2
        %v640 = vmax.f32 %v638, %v639
        %v641 = vrot.slane %v640, 1
        %v642 = vmax.f32 %v640, %v641
        %v643 = vsel %vm635, %v628, -inf
        %v644 = vrot.slane %v643, 4
        %v645 = vmax.f32 %v643, %v644
        %v646 = vrot.slane %v645, 2
        %v647 = vmax.f32 %v645, %v646
        %v648 = vrot.slane %v647, 1
        %v649 = vmax.f32 %v647, %v648
        %v650 = vsel %vm635, %v629, -inf
        %v651 = vrot.slane %v650, 4
        %v652 = vmax.f32 %v650, %v651
        %v653 = vrot.slane %v652, 2
        %v654 = vmax.f32 %v652, %v653
        %v655 = vrot.slane %v654, 1
        %v656 = vmax.f32 %v654, %v655
        %v657 = vsel %vm635, %v630, -inf
        %v658 = vrot.slane %v657, 4
        %v659 = vmax.f32 %v657, %v658
        %v660 = vrot.slane %v659, 2
        %v661 = vmax.f32 %v659, %v660
        %v662 = vrot.slane %v661, 1
        %v663 = vmax.f32 %v661, %v662
        %v664 = vsel %vm635, %v631, -inf
        %v665 = vrot.slane %v664, 4
        %v666 = vmax.f32 %v664, %v665
        %v667 = vrot.slane %v666, 2
        %v668 = vmax.f32 %v666, %v667
        %v669 = vrot.slane %v668, 1
        %v670 = vmax.f32 %v668, %v669
        %v671 = vsel %vm635, %v632, -inf
        %v672 = vrot.slane %v671, 4
        %v673 = vmax.f32 %v671, %v672
        %v674 = vrot.slane %v673, 2
        %v675 = vmax.f32 %v673, %v674
        %v676 = vrot.slane %v675, 1
        %v677 = vmax.f32 %v675, %v676
        %v678 = vsel %vm635, %v633, -inf
        %v679 = vrot.slane %v678, 4
        %v680 = vmax.f32 %v678, %v679
        %v681 = vrot.slane %v680, 2
        %v682 = vmax.f32 %v680, %v681
        %v683 = vrot.slane %v682, 1
        %v684 = vmax.f32 %v682, %v683
        %v685 = vsel %vm635, %v634, -inf
        %v686 = vrot.slane %v685, 4
        %v687 = vmax.f32 %v685, %v686
        %v688 = vrot.slane %v687, 2
        %v689 = vmax.f32 %v687, %v688
        %v690 = vrot.slane %v689, 1
        %v691 = vmax.f32 %v689, %v690
        %vm700 = vcmask 1041409
        %v701 = vsel %vm700, %v649, %v642
        %vm702 = vcmask 1042434
        %v703 = vsel %vm702, %v656, %v701
        %vm704 = vcmask 1043459
        %v705 = vsel %vm704, %v663, %v703
        %vm706 = vcmask 1044484
        %v707 = vsel %vm706, %v670, %v705
        %vm708 = vcmask 1045509
        %v709 = vsel %vm708, %v677, %v707
        %vm710 = vcmask 1046534
        %v711 = vsel %vm710, %v684, %v709
        %vm712 = vcmask 1047559
        %v713 = vsel %vm712, %v691, %v711
        %715 = vst.msk [vmem:[%s217] sm:$0xff] %vm635, %v713
        %p716 = scmp.lt.s32.totalorder %s19, 3
        %s717 = scalar_select %p716, %s19, 3
        %s718 = smul.addr %s717, 8
        %s719 = scalar_lea.vmem %s4, %s718
        // Predicated region
        $region41: #{tpu_custom_call.1} parent=35 // pred_check
          %p720 = pneg %p126
        $region42: #{tpu_custom_call.1} parent=35 // pred_check_branch
          %722 = sbr.rel (%p720) target = $region44
        $region43: #{tpu_custom_call.1} parent=35 // pred_region
          _
        $region44: #{tpu_custom_call.1} parent=35 // pred_fallthru
          _
      $region36: #{tpu_custom_call.1} parent=5 // pred_fallthru
        _
      %p723 = scmp.le.s32.totalorder 2, %s14
      // Predicated region
      $region45: #{tpu_custom_call.1} parent=5 // pred_check
        %p724 = pneg %p723
      $region46: #{tpu_custom_call.1} parent=5 // pred_check_branch
        %726 = sbr.rel (%p724) target = $region48
      $region47: #{tpu_custom_call.1} parent=5 // pred_region
        %s727 = ssub.s32 %s14, 2
        // Predicated region
        $region49: #{tpu_custom_call.1} parent=47 // pred_check
          %p728 = pneg %p132
        $region50: #{tpu_custom_call.1} parent=47 // pred_check_branch
          %730 = sbr.rel (%p728) target = $region52
        $region51: #{tpu_custom_call.1} parent=47 // pred_region
          %p731 = scmp.lt.s32.totalorder %s20, 3
          %s732 = scalar_select %p731, %s20, 3
          %s733 = smul.addr %s732, 8
          %s734 = scalar_lea.vmem %s4, %s733
        $region52: #{tpu_custom_call.1} parent=47 // pred_fallthru
          _
      $region48: #{tpu_custom_call.1} parent=5 // pred_fallthru
        _
    $region6: #{tpu_custom_call.1} parent=1 // loop_footer
      %s18 = sadd.s32 1, %s14
    $region7: #{tpu_custom_call.1} parent=1 // loop_footer_branch
      %13 = sbr.rel target = $region3
    $region8: #{tpu_custom_call.1} parent=1 // loop_exit
      _
    %735 = vsyncpa [#allocation4], 1
    %s736 = scalar_lea.sflag [#allocation4], 1
    %737 = vsyncpa %s736, 1

</llo_original>
